<compile_context>
chip_gen: v6e
topology: v6e:2x2x1
jax: 0.10.0
libtpu: 0.0.40
codegen_flags: <defaults>
</compile_context>

<pallas_src>
import jax
import jax.numpy as jnp
from jax.experimental import pallas as pl
from jax.experimental.pallas import tpu as pltpu

# Below this batch size a standalone pallas_call is pure overhead.
_SMALL_B_THRESHOLD = 8192
# Target lane-tile (v6e-ish sweet spot; ~8 MiB total double-buffered VMEM at f32).
_DEFAULT_TARGET_TB = 64 * 1024


def stn_square_kernel(inp_ref, theta_ref):
    """Builds the transposed theta slab for one batch tile.

    inp_ref   : (4, TB) VMEM  rows = [loc0, loc1, tr0, tr1] over the lane
                              (batch) axis — merged loc/trans input slab.
    theta_ref : (6, TB) VMEM  rows = [loc0, 0, tr0, 0, loc1, tr1]
                              (row-major flatten of the (2, 3) theta).
    """
    loc0 = inp_ref[0, :]
    loc1 = inp_ref[1, :]
    tr0 = inp_ref[2, :]
    tr1 = inp_ref[3, :]
    zeros = jnp.zeros_like(loc0)

    theta_ref[0, :] = loc0    # theta[:, 0, 0] = localization[:, 0]
    theta_ref[1, :] = zeros   # theta[:, 0, 1] = 0 (killed by identity mask)
    theta_ref[2, :] = tr0     # theta[:, 0, 2] = translation[:, 0]
    theta_ref[3, :] = zeros   # theta[:, 1, 0] = 0 (killed by identity mask)
    theta_ref[4, :] = loc1    # theta[:, 1, 1] = localization[:, 1]
    theta_ref[5, :] = tr1     # theta[:, 1, 2] = translation[:, 1]


def _pick_tile(batch, target_tb):
    """Adaptive lane tile: multiple of 128, >=2 blocks when possible, capped."""
    # Cap so that the grid has at least 2 steps when B allows it (v7x: 2 TCs
    # split the "parallel" axis; a single giant tile would idle one TC).
    half = -(-batch // 2)                      # ceil(B / 2)
    half_rounded = ((half + 127) // 128) * 128
    tb = min(target_tb, half_rounded)
    tb = max(tb, 128)
    assert tb % 128 == 0 and tb >= 128, tb
    return tb


def stn_square_ref(localization, translation):
    """Pure-JAX reference mirroring the PyTorch module exactly."""
    mask = jnp.eye(2, dtype=localization.dtype)[None, :, :]          # (1,2,2)
    loc = jnp.repeat(localization[:, :, None], 2, axis=2)            # (B,2,2)
    loc = loc * mask                                                 # identity mask
    theta = jnp.concatenate([loc, translation[:, :, None]], axis=2)  # (B,2,3)
    return theta


def stn_square(localization, translation, *, tb=None,
               target_tb=_DEFAULT_TARGET_TB, use_pallas=None):
    """JAX wrapper matching STN_Square.forward.

    localization: (B, 2), translation: (B, 2) -> theta: (B, 2, 3)

    tb: explicit lane tile (must be a positive multiple of 128); if None it is
        chosen adaptively from B and target_tb.
    use_pallas: force/skip the Pallas path; default (None) skips it for small
        B where launch + relayout overhead dwarfs the real work.
    """
    assert localization.shape == translation.shape
    assert localization.ndim == 2 and localization.shape[-1] == 2
    assert localization.dtype == translation.dtype, "loc/trans dtypes must match"
    B = localization.shape[0]
    dtype = localization.dtype

    if use_pallas is None:
        use_pallas = B >= _SMALL_B_THRESHOLD
    if not use_pallas:
        # Small-B fast path: a standalone pallas_call cannot win here.
        return stn_square_ref(localization, translation)

    if tb is None:
        tb = _pick_tile(B, target_tb)
    assert isinstance(tb, int) and tb >= 128 and tb % 128 == 0, (
        "tb must be a positive multiple of 128, got %r" % (tb,))

    # Lane-dense layout: batch on the 128-lane axis; merge loc/trans into one
    # (4, B) slab so each grid step needs a single input DMA / VMEM tile.
    # NOTE: if bf16 inputs are used, the sublane min-tile is 16 rows, doubling
    # the padding waste of the 4-row / 6-row slabs (merging already mitigates
    # the worst of it).
    inp_t = jnp.concatenate([localization.T, translation.T], axis=0)  # (4, B)

    # Pad batch to a multiple of the lane tile.
    num_blocks = pl.cdiv(B, tb)
    bp = num_blocks * tb
    if bp != B:
        inp_t = jnp.pad(inp_t, ((0, 0), (0, bp - B)))

    itemsize = jnp.dtype(dtype).itemsize
    cost = pl.CostEstimate(
        flops=0,
        transcendentals=0,
        bytes_accessed=(4 + 6) * bp * itemsize,
    )

    theta_t = pl.pallas_call(
        stn_square_kernel,
        out_shape=jax.ShapeDtypeStruct((6, bp), dtype),
        grid_spec=pltpu.PrefetchScalarGridSpec(
            num_scalar_prefetch=0,
            grid=(num_blocks,),
            in_specs=[
                pl.BlockSpec((4, tb), lambda i: (0, i)),
            ],
            out_specs=pl.BlockSpec((6, tb), lambda i: (0, i)),
        ),
        compiler_params=pltpu.CompilerParams(
            dimension_semantics=("parallel",),
            vmem_limit_bytes=64 << 20,  # headroom even for tb up to ~256K f32
        ),
        cost_estimate=cost,
    )(inp_t)

    # (6, Bp) -> (B, 6) -> (B, 2, 3): rows are the row-major flatten of the
    # 2x3 theta, so this is the exact PyTorch output layout.
    # TODO(synk): drop this relayout if the consumer can read (6, B) directly.
    theta = theta_t[:, :B].T.reshape(B, 2, 3)
    return theta


if __name__ == "__main__":
    key = jax.random.PRNGKey(0)

    # Small shape consistent with the module: batch=2, feature dim 2.
    k_loc, k_tr = jax.random.split(key)
    B = 2
    localization = jax.random.normal(k_loc, (B, 2), dtype=jnp.float32)
    translation = jax.random.normal(k_tr, (B, 2), dtype=jnp.float32)

    # Force the Pallas path so the kernel is actually exercised at small B.
    theta = stn_square(localization, translation, use_pallas=True)
    theta = jax.block_until_ready(theta)
    expected = stn_square_ref(localization, translation)
    assert theta.shape == (B, 2, 3), theta.shape
    assert jnp.allclose(theta, expected, atol=1e-6), (theta, expected)

    # Second check: batch not a multiple of 128, exercises adaptive tiling
    # with num_blocks >= 2 and the padded-tail slicing.
    k_loc2, k_tr2 = jax.random.split(jax.random.PRNGKey(1))
    B2 = 300
    loc2 = jax.random.normal(k_loc2, (B2, 2), dtype=jnp.float32)
    tr2 = jax.random.normal(k_tr2, (B2, 2), dtype=jnp.float32)
    theta2 = jax.block_until_ready(stn_square(loc2, tr2, use_pallas=True))
    expected2 = stn_square_ref(loc2, tr2)
    assert theta2.shape == (B2, 2, 3), theta2.shape
    assert jnp.allclose(theta2, expected2, atol=1e-6)

    # Default path at small B takes the jnp fast path (no pallas_call).
    theta_fast = jax.block_until_ready(stn_square(localization, translation))
    assert jnp.allclose(theta_fast, expected, atol=1e-6)

    print("KERNEL_OK")
</pallas_src>

<mosaic_0001>
module attributes {stable_mosaic.version = 11 : i64} {
  func.func @stn_square_kernel(%arg0: i32, %arg1: memref<4x128xf32, #tpu.memory_space<vmem>>, %arg2: memref<6x128xf32, #tpu.memory_space<vmem>>) attributes {dimension_semantics = [#tpu.dimension_semantics<parallel>], iteration_bounds = array<i64: 1>, scalar_prefetch = 0 : i64, scratch_operands = 0 : i64, tpu.core_type = #tpu.core_type<tc>, window_params = [{transform_indices = @transform_0, window_bounds = array<i64: 4, 128>}, {transform_indices = @transform_1, window_bounds = array<i64: 6, 128>}]} {
    %c0 = arith.constant 0 : index
    %c0_0 = arith.constant 0 : index
    %0 = vector.load %arg1[%c0, %c0_0] : memref<4x128xf32, #tpu.memory_space<vmem>>, vector<1x128xf32>
    %1 = vector.shape_cast %0 : vector<1x128xf32> to vector<128xf32>
    %c1 = arith.constant 1 : index
    %c0_1 = arith.constant 0 : index
    %2 = vector.load %arg1[%c1, %c0_1] : memref<4x128xf32, #tpu.memory_space<vmem>>, vector<1x128xf32>
    %3 = vector.shape_cast %2 : vector<1x128xf32> to vector<128xf32>
    %c2 = arith.constant 2 : index
    %c0_2 = arith.constant 0 : index
    %4 = vector.load %arg1[%c2, %c0_2] : memref<4x128xf32, #tpu.memory_space<vmem>>, vector<1x128xf32>
    %5 = vector.shape_cast %4 : vector<1x128xf32> to vector<128xf32>
    %c3 = arith.constant 3 : index
    %c0_3 = arith.constant 0 : index
    %6 = vector.load %arg1[%c3, %c0_3] : memref<4x128xf32, #tpu.memory_space<vmem>>, vector<1x128xf32>
    %7 = vector.shape_cast %6 : vector<1x128xf32> to vector<128xf32>
    %cst = arith.constant 0.000000e+00 : f32
    %8 = vector.broadcast %cst : f32 to vector<128xf32>
    %c0_4 = arith.constant 0 : index
    %c0_5 = arith.constant 0 : index
    %9 = vector.load %arg2[%c0_4, %c0_5] : memref<6x128xf32, #tpu.memory_space<vmem>>, vector<1x128xf32>
    %10 = vector.shape_cast %9 : vector<1x128xf32> to vector<128xf32>
    %11 = vector.shape_cast %1 : vector<128xf32> to vector<1x128xf32>
    tpu.vector_store %arg2[%c0_4, %c0_5], %11 {strides = array<i32>} : memref<6x128xf32, #tpu.memory_space<vmem>>, vector<1x128xf32>,
    %c1_6 = arith.constant 1 : index
    %c0_7 = arith.constant 0 : index
    %12 = vector.load %arg2[%c1_6, %c0_7] : memref<6x128xf32, #tpu.memory_space<vmem>>, vector<1x128xf32>
    %13 = vector.shape_cast %12 : vector<1x128xf32> to vector<128xf32>
    %14 = vector.shape_cast %8 : vector<128xf32> to vector<1x128xf32>
    tpu.vector_store %arg2[%c1_6, %c0_7], %14 {strides = array<i32>} : memref<6x128xf32, #tpu.memory_space<vmem>>, vector<1x128xf32>,
    %c2_8 = arith.constant 2 : index
    %c0_9 = arith.constant 0 : index
    %15 = vector.load %arg2[%c2_8, %c0_9] : memref<6x128xf32, #tpu.memory_space<vmem>>, vector<1x128xf32>
    %16 = vector.shape_cast %15 : vector<1x128xf32> to vector<128xf32>
    %17 = vector.shape_cast %5 : vector<128xf32> to vector<1x128xf32>
    tpu.vector_store %arg2[%c2_8, %c0_9], %17 {strides = array<i32>} : memref<6x128xf32, #tpu.memory_space<vmem>>, vector<1x128xf32>,
    %c3_10 = arith.constant 3 : index
    %c0_11 = arith.constant 0 : index
    %18 = vector.load %arg2[%c3_10, %c0_11] : memref<6x128xf32, #tpu.memory_space<vmem>>, vector<1x128xf32>
    %19 = vector.shape_cast %18 : vector<1x128xf32> to vector<128xf32>
    %20 = vector.shape_cast %8 : vector<128xf32> to vector<1x128xf32>
    tpu.vector_store %arg2[%c3_10, %c0_11], %20 {strides = array<i32>} : memref<6x128xf32, #tpu.memory_space<vmem>>, vector<1x128xf32>,
    %c4 = arith.constant 4 : index
    %c0_12 = arith.constant 0 : index
    %21 = vector.load %arg2[%c4, %c0_12] : memref<6x128xf32, #tpu.memory_space<vmem>>, vector<1x128xf32>
    %22 = vector.shape_cast %21 : vector<1x128xf32> to vector<128xf32>
    %23 = vector.shape_cast %3 : vector<128xf32> to vector<1x128xf32>
    tpu.vector_store %arg2[%c4, %c0_12], %23 {strides = array<i32>} : memref<6x128xf32, #tpu.memory_space<vmem>>, vector<1x128xf32>,
    %c5 = arith.constant 5 : index
    %c0_13 = arith.constant 0 : index
    %24 = vector.load %arg2[%c5, %c0_13] : memref<6x128xf32, #tpu.memory_space<vmem>>, vector<1x128xf32>
    %25 = vector.shape_cast %24 : vector<1x128xf32> to vector<128xf32>
    %26 = vector.shape_cast %7 : vector<128xf32> to vector<1x128xf32>
    tpu.vector_store %arg2[%c5, %c0_13], %26 {strides = array<i32>} : memref<6x128xf32, #tpu.memory_space<vmem>>, vector<1x128xf32>,
    return
  }
  func.func @transform_0(%arg0: i32) -> (i32, i32) {
    %c0_i32 = arith.constant 0 : i32
    %c0_i32_0 = arith.constant 0 : i32
    return %c0_i32, %arg0 : i32, i32
  }
  func.func @transform_1(%arg0: i32) -> (i32, i32) {
    %c0_i32 = arith.constant 0 : i32
    %c0_i32_0 = arith.constant 0 : i32
    return %c0_i32, %arg0 : i32, i32
  }
}

</mosaic_0001>

<llo_original>
// kernel: tpu_custom_call.1
$region0: #{tpu_custom_call.1}
  #allocation0 [shape = 'u32[]', space=smem, size = 0x4, offset = 0x4, fixed_abs, tag = 'smem constant byte address 0x4 - core index']
  #allocation1 [shape = 'u32[144,128]{1,0:T(1,128)}', space=vmem, size = 0x12000, scoped, tag = 'internal scratch']
  %s0 = inlined_call_operand.hbm [shape: f32[4,128], index: 0, kind: input, shape index: {}]
  %s1 = inlined_call_operand.hbm [shape: f32[6,128], index: 1, kind: output, shape index: {}]
  %s2 = sld [smem:[#allocation0]]
  $region18: #{tpu_custom_call.1} parent=0
    _
  %s4 = ssub.s32 1, %s2
  %s5 = scalar_select 0, %s4, %s2
  $region1: #{tpu_custom_call.1} parent=0
    #allocation2 [shape = 'u8[2048]{0}', space=vmem, size = 0x800, scoped, tag = 'input window, operand 0, single buffered']
    #allocation3 [shape = 's32[1]{0}', space=sflag, size = 0x4, scoped, tag = 'scoped memory for tpu_custom_call.1']
    #allocation4 [shape = 's32[1]{0}', space=sflag, size = 0x4, scoped, tag = 'scoped memory for tpu_custom_call.1']
    #allocation5 [shape = 'u8[4096]{0}', space=vmem, size = 0x1000, scoped, tag = 'output window, operand 0, single buffered']
    %6 = vsyncpa [#allocation3], 0
    %7 = vsyncpa [#allocation4], 0
    // Predicated region
    $region2: #{tpu_custom_call.1} parent=1 // pred_check
      _
    $region3: #{tpu_custom_call.1} parent=1 // pred_check_branch
      %9 = sbr.rel (0) target = $region5
    $region4: #{tpu_custom_call.1} parent=1 // pred_region
      %s11 = ssub.s32 64, 64
      %12 = vsyncadd [#allocation3], %s11
      %s14 = sshll.u32 [#allocation2], 4
      %s15 = int_to_ptr.vmem [resolvable:$true] %s14
      %17 = dma.hbm_to_vmem [thread:$0]  %s0, 64, %s15, [#allocation3]
    $region5: #{tpu_custom_call.1} parent=1 // pred_fallthru
      _
    // Predicated region
    $region6: #{tpu_custom_call.1} parent=1 // pred_check
      _
    $region7: #{tpu_custom_call.1} parent=1 // pred_check_branch
      %19 = sbr.rel (0) target = $region9
    $region8: #{tpu_custom_call.1} parent=1 // pred_region
      %20 = dma.done [#allocation3], 64
    $region9: #{tpu_custom_call.1} parent=1 // pred_fallthru
      _
    %v21 = vld [vmem:[#allocation2] sm:$0x1]
    %v22 = vld [vmem:[#allocation2 + $0x1] sm:$0x1]
    %v23 = vld [vmem:[#allocation2 + $0x2] sm:$0x1]
    %v24 = vld [vmem:[#allocation2 + $0x3] sm:$0x1]
    %25 = vst [vmem:[#allocation5] sm:$0x1] %v21
    %26 = vst [vmem:[#allocation5 + $0x1] sm:$0x1] 0.0
    %27 = vst [vmem:[#allocation5 + $0x2] sm:$0x1] %v23
    %28 = vst [vmem:[#allocation5 + $0x3] sm:$0x1] 0.0
    %29 = vst [vmem:[#allocation5 + $0x4] sm:$0x1] %v22
    %30 = vst [vmem:[#allocation5 + $0x5] sm:$0x1] %v24
    // Predicated region
    $region10: #{tpu_custom_call.1} parent=1 // pred_check
      _
    $region11: #{tpu_custom_call.1} parent=1 // pred_check_branch
      %32 = sbr.rel (0) target = $region13
    $region12: #{tpu_custom_call.1} parent=1 // pred_region
      %s34 = ssub.s32 128, 128
      %35 = vsyncadd [#allocation4], %s34
      %s37 = sshll.u32 [#allocation5], 4
      %s38 = int_to_ptr.vmem [resolvable:$true] %s37
      %40 = dma.vmem_to_hbm [thread:$0]  %s38, 128, %s1, [#allocation4]
    $region13: #{tpu_custom_call.1} parent=1 // pred_fallthru
      _
    // Predicated region
    $region14: #{tpu_custom_call.1} parent=1 // pred_check
      _
    $region15: #{tpu_custom_call.1} parent=1 // pred_check_branch
      %42 = sbr.rel (0) target = $region17
    $region16: #{tpu_custom_call.1} parent=1 // pred_region
      %43 = dma.done [#allocation4], 128
    $region17: #{tpu_custom_call.1} parent=1 // pred_fallthru
      _
    %44 = vsyncpa [#allocation3], 1
    %45 = vsyncpa [#allocation4], 1

</llo_original>
